<compile_context>
chip_gen: v7x
topology: tpu7x:2x2x1
jax: 0.10.0
libtpu: 0.0.40
codegen_flags: <defaults>
</compile_context>

<pallas_src>
import functools

import jax
import jax.numpy as jnp
from jax.experimental import pallas as pl
from jax.experimental.pallas import tpu as pltpu


def _lstm_kernel(seq_length, hidden_dim,
                 x_ref,        # (T, Bp, 1)  f32
                 w_x_all_ref,  # (1, 4H)     packed [g, i, f, o] (g cols pre-scaled x2)
                 w_h_all_ref,  # (H, 4H)     packed [g, i, f, o] (g cols pre-scaled x2)
                 b_all_ref,    # (1, 4H)     packed [g, i, f, o] (g cols pre-scaled x2)
                 w_ph_ref,     # (H, Op)     output projection (lane-padded)
                 b_p_ref,      # (1, Op)
                 out_ref):     # (Bp, Op)
    H = hidden_dim

    # ---- hoist all weight loads out of the recurrence (vreg resident) -------
    w_h_all = w_h_all_ref[...]                        # (H, 4H): 4 vregs at H=32
    w_x_row = w_x_all_ref[...].reshape(1, 1, 4 * H)   # (1, 1, 4H)
    b_row = b_all_ref[...].reshape(1, 1, 4 * H)       # (1, 1, 4H)

    # ---- input projection for ALL timesteps, kept as SSA values -------------
    # input_dim == 1  =>  x_t @ W_x is an outer product: pure VPU broadcast.
    # (T, Bp, 4H) = 8 vregs at these shapes -- no VMEM scratch round trip.
    xproj = x_ref[...] * w_x_row + b_row              # (T, Bp, 4H)

    def act(gates):
        # ONE EUP sigmoid over the full (Bp, 4H) vreg; g-gate columns were
        # pre-scaled by 2 at pack time so tanh(x) = 2*sigmoid(2x) - 1.
        s = jax.nn.sigmoid(gates)
        g = 2.0 * s[:, :H] - 1.0                      # one VPU fma
        i = s[:, H:2 * H]
        f = s[:, 2 * H:3 * H]
        o = s[:, 3 * H:]
        return g, i, f, o

    # ---- peeled t = 0: h = c = 0, so gates == xproj[0] and c*f vanishes -----
    g, i, f, o = act(xproj[0])
    c = g * i
    h = jnp.tanh(c) * o

    # ---- recurrence: fully unrolled, one packed MXU matmul per step ---------
    for t in range(1, seq_length):                    # static unroll
        gates = xproj[t] + jnp.dot(
            h, w_h_all, preferred_element_type=jnp.float32)   # (Bp, 4H)
        g, i, f, o = act(gates)
        c = g * i + c * f
        h = jnp.tanh(c) * o

    # ---- output projection: lane-dense padded store -------------------------
    out_ref[...] = (jnp.dot(h, w_ph_ref[...],
                            preferred_element_type=jnp.float32)
                    + b_p_ref[...]).astype(out_ref.dtype)


def pack_lstm_params(params, *, hidden_dim, output_dim):
    """Pack/pad raw LSTM params once (reuse across calls; off the hot path)."""
    (w_gx, w_gh, b_g,
     w_ix, w_ih, b_i,
     w_fx, w_fh, b_f,
     w_ox, w_oh, b_o,
     w_ph, b_p) = params

    Op = max(128, ((output_dim + 127) // 128) * 128)    # lane-dense output

    # Pack gates [g, i, f, o] along the last axis -> single recurrent matmul.
    # The g-gate columns are pre-scaled by 2 so the kernel can use a single
    # sigmoid over all gates and recover g = 2*sigmoid(2x) - 1 == tanh(x).
    w_x_all = jnp.concatenate([2.0 * w_gx, w_ix, w_fx, w_ox], axis=1)  # (1, 4H)
    w_h_all = jnp.concatenate([2.0 * w_gh, w_ih, w_fh, w_oh], axis=1)  # (H, 4H)
    b_all = jnp.concatenate([2.0 * b_g, b_i, b_f, b_o],
                            axis=0).reshape(1, -1)                     # (1, 4H)

    # Lane-pad the output projection (padding sliced away after the call).
    w_ph_pad = jnp.pad(w_ph, ((0, 0), (0, Op - output_dim)))
    b_p_pad = jnp.pad(b_p.reshape(1, -1), ((0, 0), (0, Op - output_dim)))

    return (w_x_all, w_h_all, b_all, w_ph_pad, b_p_pad)


def lstm_forward(x, packed, *, seq_length, hidden_dim, output_dim, batch_size):
    """x: (batch_size, seq_length) float32.  Returns (batch_size, output_dim)."""
    w_x_all, w_h_all, b_all, w_ph_pad, b_p_pad = packed

    B = batch_size
    Bp = max(8, ((B + 7) // 8) * 8)                     # sublane-aligned batch
    Op = w_ph_pad.shape[1]

    # x: (B, T) -> (T, Bp, 1): leading-axis time indexing inside the kernel,
    # sublane-aligned (padded) batch.  Pure layout plumbing, no compute hoisted.
    x_pad = jnp.pad(x, ((0, Bp - B), (0, 0)))
    x_tb = x_pad.T.reshape(seq_length, Bp, 1)

    inputs = (x_tb, w_x_all, w_h_all, b_all, w_ph_pad, b_p_pad)
    vmem_spec = pl.BlockSpec(memory_space=pltpu.MemorySpace.VMEM)

    # Grid-less single invocation: total VMEM footprint < 100 KB.
    # TODO(synk): for large batch, add a batch grid axis with
    # dimension_semantics=("parallel",) (sized against v7x's 64 MiB VMEM /
    # 32 MiB scoped default, e.g. Bp_tile=512) to use both v7x TensorCores;
    # for many independent sequences, batch them into one pallas_call rather
    # than calling per small batch -- fixed call/DMA overhead dominates here.
    out_pad = pl.pallas_call(
        functools.partial(_lstm_kernel, seq_length, hidden_dim),
        out_shape=jax.ShapeDtypeStruct((Bp, Op), jnp.float32),
        in_specs=[vmem_spec] * len(inputs),
        out_specs=vmem_spec,
    )(*inputs)

    return out_pad[:B, :output_dim]


def lstm_reference(x, params):
    """Pure-JAX reference mirroring the PyTorch forward exactly."""
    (w_gx, w_gh, b_g,
     w_ix, w_ih, b_i,
     w_fx, w_fh, b_f,
     w_ox, w_oh, b_o,
     w_ph, b_p) = params
    B = x.shape[0]
    H = w_gh.shape[0]
    h = jnp.zeros((B, H), jnp.float32)
    c = jnp.zeros((B, H), jnp.float32)
    for t in range(x.shape[1]):
        x_t = x[:, t:t + 1]
        g = jnp.tanh(x_t @ w_gx + h @ w_gh + b_g)
        i = jax.nn.sigmoid(x_t @ w_ix + h @ w_ih + b_i)
        f = jax.nn.sigmoid(x_t @ w_fx + h @ w_fh + b_f)
        o = jax.nn.sigmoid(x_t @ w_ox + h @ w_oh + b_o)
        c = g * i + c * f
        h = jnp.tanh(c) * o
    return h @ w_ph + b_p


if __name__ == "__main__":
    # small shapes consistent with the module
    seq_length = 8
    input_dim = 1          # x[:, t:t+1] @ W_gx  =>  input_dim must be 1
    hidden_dim = 32
    output_dim = 10
    batch_size = 4

    key = jax.random.PRNGKey(0)
    keys = jax.random.split(key, 15)

    def rn(k, shape):
        return jax.random.normal(k, shape, dtype=jnp.float32)

    params = (
        rn(keys[0], (input_dim, hidden_dim)),   # W_gx
        rn(keys[1], (hidden_dim, hidden_dim)),  # W_gh
        rn(keys[2], (hidden_dim,)),             # b_g
        rn(keys[3], (input_dim, hidden_dim)),   # W_ix
        rn(keys[4], (hidden_dim, hidden_dim)),  # W_ih
        rn(keys[5], (hidden_dim,)),             # b_i
        rn(keys[6], (input_dim, hidden_dim)),   # W_fx
        rn(keys[7], (hidden_dim, hidden_dim)),  # W_fh
        rn(keys[8], (hidden_dim,)),             # b_f
        rn(keys[9], (input_dim, hidden_dim)),   # W_ox
        rn(keys[10], (hidden_dim, hidden_dim)), # W_oh
        rn(keys[11], (hidden_dim,)),            # b_o
        rn(keys[12], (hidden_dim, output_dim)), # W_ph
        rn(keys[13], (output_dim,)),            # b_p
    )

    x = rn(keys[14], (batch_size, seq_length))

    # Pack/pad once, off the hot path; reuse across calls.
    packed = pack_lstm_params(params, hidden_dim=hidden_dim,
                              output_dim=output_dim)
    packed = jax.block_until_ready(packed)

    fwd = jax.jit(functools.partial(lstm_forward,
                                    seq_length=seq_length,
                                    hidden_dim=hidden_dim,
                                    output_dim=output_dim,
                                    batch_size=batch_size))

    out = fwd(x, packed)
    out = jax.block_until_ready(out)

    ref = lstm_reference(x, params)
    assert out.shape == (batch_size, output_dim)
    assert jnp.allclose(out, ref, atol=1e-4, rtol=1e-4), "mismatch vs reference"

    print("KERNEL_OK")
</pallas_src>

<mosaic_0001>
module attributes {stable_mosaic.version = 11 : i64} {
  func.func @_lstm_kernel(%arg0: memref<8x8x1xf32, #tpu.memory_space<vmem>>, %arg1: memref<1x128xf32, #tpu.memory_space<vmem>>, %arg2: memref<32x128xf32, #tpu.memory_space<vmem>>, %arg3: memref<1x128xf32, #tpu.memory_space<vmem>>, %arg4: memref<32x128xf32, #tpu.memory_space<vmem>>, %arg5: memref<1x128xf32, #tpu.memory_space<vmem>>, %arg6: memref<8x128xf32, #tpu.memory_space<vmem>>) attributes {dimension_semantics = [], scalar_prefetch = 0 : i64, scratch_operands = 0 : i64, tpu.core_type = #tpu.core_type<tc>} {
    %c0 = arith.constant 0 : index
    %c0_0 = arith.constant 0 : index
    %0 = vector.load %arg2[%c0, %c0_0] : memref<32x128xf32, #tpu.memory_space<vmem>>, vector<32x128xf32>
    %c0_1 = arith.constant 0 : index
    %c0_2 = arith.constant 0 : index
    %1 = vector.load %arg1[%c0_1, %c0_2] : memref<1x128xf32, #tpu.memory_space<vmem>>, vector<1x128xf32>
    %2 = vector.shape_cast %1 : vector<1x128xf32> to vector<1x1x128xf32>
    %c0_3 = arith.constant 0 : index
    %c0_4 = arith.constant 0 : index
    %3 = vector.load %arg3[%c0_3, %c0_4] : memref<1x128xf32, #tpu.memory_space<vmem>>, vector<1x128xf32>
    %4 = vector.shape_cast %3 : vector<1x128xf32> to vector<1x1x128xf32>
    %c0_5 = arith.constant 0 : index
    %c0_6 = arith.constant 0 : index
    %c0_7 = arith.constant 0 : index
    %5 = vector.load %arg0[%c0_5, %c0_6, %c0_7] : memref<8x8x1xf32, #tpu.memory_space<vmem>>, vector<8x8x1xf32>
    %6 = vector.broadcast %5 : vector<8x8x1xf32> to vector<8x8x128xf32>
    %7 = vector.broadcast %2 : vector<1x1x128xf32> to vector<8x8x128xf32>
    %8 = arith.mulf %6, %7 : vector<8x8x128xf32>
    %9 = vector.broadcast %4 : vector<1x1x128xf32> to vector<8x8x128xf32>
    %10 = arith.addf %8, %9 : vector<8x8x128xf32>
    %11 = vector.extract_strided_slice %10 {offsets = [0, 0, 0], sizes = [1, 8, 128], strides = [1, 1, 1]} : vector<8x8x128xf32> to vector<1x8x128xf32>
    %12 = vector.shape_cast %11 : vector<1x8x128xf32> to vector<8x128xf32>
    %13 = arith.negf %12 : vector<8x128xf32>
    %14 = math.exp %13 : vector<8x128xf32>
    %cst = arith.constant 1.000000e+00 : f32
    %15 = vector.broadcast %cst : f32 to vector<8x128xf32>
    %16 = arith.addf %15, %14 : vector<8x128xf32>
    %17 = arith.divf %15, %16 : vector<8x128xf32>
    %18 = vector.extract_strided_slice %17 {offsets = [0, 0], sizes = [8, 32], strides = [1, 1]} : vector<8x128xf32> to vector<8x32xf32>
    %cst_8 = arith.constant 2.000000e+00 : f32
    %19 = vector.broadcast %cst_8 : f32 to vector<8x32xf32>
    %20 = arith.mulf %19, %18 : vector<8x32xf32>
    %cst_9 = arith.constant 1.000000e+00 : f32
    %21 = vector.broadcast %cst_9 : f32 to vector<8x32xf32>
    %22 = arith.subf %20, %21 : vector<8x32xf32>
    %23 = vector.extract_strided_slice %17 {offsets = [0, 32], sizes = [8, 32], strides = [1, 1]} : vector<8x128xf32> to vector<8x32xf32>
    %24 = vector.extract_strided_slice %17 {offsets = [0, 96], sizes = [8, 32], strides = [1, 1]} : vector<8x128xf32> to vector<8x32xf32>
    %25 = arith.mulf %22, %23 : vector<8x32xf32>
    %26 = math.tanh %25 : vector<8x32xf32>
    %27 = arith.mulf %26, %24 : vector<8x32xf32>
    %28 = vector.extract_strided_slice %10 {offsets = [1, 0, 0], sizes = [1, 8, 128], strides = [1, 1, 1]} : vector<8x8x128xf32> to vector<1x8x128xf32>
    %29 = vector.shape_cast %28 : vector<1x8x128xf32> to vector<8x128xf32>
    %cst_10 = arith.constant dense<0.000000e+00> : vector<8x128xf32>
    %30 = tpu.matmul %27, %0, %cst_10 {dimension_numbers = #tpu.dot_dimension_numbers<[1], [0], [0], [1], [0, 0, 1, 1], [], []>} : vector<8x32xf32>, vector<32x128xf32>, vector<8x128xf32> -> vector<8x128xf32>
    %31 = arith.addf %29, %30 : vector<8x128xf32>
    %32 = arith.negf %31 : vector<8x128xf32>
    %33 = math.exp %32 : vector<8x128xf32>
    %cst_11 = arith.constant 1.000000e+00 : f32
    %34 = vector.broadcast %cst_11 : f32 to vector<8x128xf32>
    %35 = arith.addf %34, %33 : vector<8x128xf32>
    %36 = arith.divf %34, %35 : vector<8x128xf32>
    %37 = vector.extract_strided_slice %36 {offsets = [0, 0], sizes = [8, 32], strides = [1, 1]} : vector<8x128xf32> to vector<8x32xf32>
    %cst_12 = arith.constant 2.000000e+00 : f32
    %38 = vector.broadcast %cst_12 : f32 to vector<8x32xf32>
    %39 = arith.mulf %38, %37 : vector<8x32xf32>
    %cst_13 = arith.constant 1.000000e+00 : f32
    %40 = vector.broadcast %cst_13 : f32 to vector<8x32xf32>
    %41 = arith.subf %39, %40 : vector<8x32xf32>
    %42 = vector.extract_strided_slice %36 {offsets = [0, 32], sizes = [8, 32], strides = [1, 1]} : vector<8x128xf32> to vector<8x32xf32>
    %43 = vector.extract_strided_slice %36 {offsets = [0, 64], sizes = [8, 32], strides = [1, 1]} : vector<8x128xf32> to vector<8x32xf32>
    %44 = vector.extract_strided_slice %36 {offsets = [0, 96], sizes = [8, 32], strides = [1, 1]} : vector<8x128xf32> to vector<8x32xf32>
    %45 = arith.mulf %41, %42 : vector<8x32xf32>
    %46 = arith.mulf %25, %43 : vector<8x32xf32>
    %47 = arith.addf %45, %46 : vector<8x32xf32>
    %48 = math.tanh %47 : vector<8x32xf32>
    %49 = arith.mulf %48, %44 : vector<8x32xf32>
    %50 = vector.extract_strided_slice %10 {offsets = [2, 0, 0], sizes = [1, 8, 128], strides = [1, 1, 1]} : vector<8x8x128xf32> to vector<1x8x128xf32>
    %51 = vector.shape_cast %50 : vector<1x8x128xf32> to vector<8x128xf32>
    %cst_14 = arith.constant dense<0.000000e+00> : vector<8x128xf32>
    %52 = tpu.matmul %49, %0, %cst_14 {dimension_numbers = #tpu.dot_dimension_numbers<[1], [0], [0], [1], [0, 0, 1, 1], [], []>} : vector<8x32xf32>, vector<32x128xf32>, vector<8x128xf32> -> vector<8x128xf32>
    %53 = arith.addf %51, %52 : vector<8x128xf32>
    %54 = arith.negf %53 : vector<8x128xf32>
    %55 = math.exp %54 : vector<8x128xf32>
    %cst_15 = arith.constant 1.000000e+00 : f32
    %56 = vector.broadcast %cst_15 : f32 to vector<8x128xf32>
    %57 = arith.addf %56, %55 : vector<8x128xf32>
    %58 = arith.divf %56, %57 : vector<8x128xf32>
    %59 = vector.extract_strided_slice %58 {offsets = [0, 0], sizes = [8, 32], strides = [1, 1]} : vector<8x128xf32> to vector<8x32xf32>
    %cst_16 = arith.constant 2.000000e+00 : f32
    %60 = vector.broadcast %cst_16 : f32 to vector<8x32xf32>
    %61 = arith.mulf %60, %59 : vector<8x32xf32>
    %cst_17 = arith.constant 1.000000e+00 : f32
    %62 = vector.broadcast %cst_17 : f32 to vector<8x32xf32>
    %63 = arith.subf %61, %62 : vector<8x32xf32>
    %64 = vector.extract_strided_slice %58 {offsets = [0, 32], sizes = [8, 32], strides = [1, 1]} : vector<8x128xf32> to vector<8x32xf32>
    %65 = vector.extract_strided_slice %58 {offsets = [0, 64], sizes = [8, 32], strides = [1, 1]} : vector<8x128xf32> to vector<8x32xf32>
    %66 = vector.extract_strided_slice %58 {offsets = [0, 96], sizes = [8, 32], strides = [1, 1]} : vector<8x128xf32> to vector<8x32xf32>
    %67 = arith.mulf %63, %64 : vector<8x32xf32>
    %68 = arith.mulf %47, %65 : vector<8x32xf32>
    %69 = arith.addf %67, %68 : vector<8x32xf32>
    %70 = math.tanh %69 : vector<8x32xf32>
    %71 = arith.mulf %70, %66 : vector<8x32xf32>
    %72 = vector.extract_strided_slice %10 {offsets = [3, 0, 0], sizes = [1, 8, 128], strides = [1, 1, 1]} : vector<8x8x128xf32> to vector<1x8x128xf32>
    %73 = vector.shape_cast %72 : vector<1x8x128xf32> to vector<8x128xf32>
    %cst_18 = arith.constant dense<0.000000e+00> : vector<8x128xf32>
    %74 = tpu.matmul %71, %0, %cst_18 {dimension_numbers = #tpu.dot_dimension_numbers<[1], [0], [0], [1], [0, 0, 1, 1], [], []>} : vector<8x32xf32>, vector<32x128xf32>, vector<8x128xf32> -> vector<8x128xf32>
    %75 = arith.addf %73, %74 : vector<8x128xf32>
    %76 = arith.negf %75 : vector<8x128xf32>
    %77 = math.exp %76 : vector<8x128xf32>
    %cst_19 = arith.constant 1.000000e+00 : f32
    %78 = vector.broadcast %cst_19 : f32 to vector<8x128xf32>
    %79 = arith.addf %78, %77 : vector<8x128xf32>
    %80 = arith.divf %78, %79 : vector<8x128xf32>
    %81 = vector.extract_strided_slice %80 {offsets = [0, 0], sizes = [8, 32], strides = [1, 1]} : vector<8x128xf32> to vector<8x32xf32>
    %cst_20 = arith.constant 2.000000e+00 : f32
    %82 = vector.broadcast %cst_20 : f32 to vector<8x32xf32>
    %83 = arith.mulf %82, %81 : vector<8x32xf32>
    %cst_21 = arith.constant 1.000000e+00 : f32
    %84 = vector.broadcast %cst_21 : f32 to vector<8x32xf32>
    %85 = arith.subf %83, %84 : vector<8x32xf32>
    %86 = vector.extract_strided_slice %80 {offsets = [0, 32], sizes = [8, 32], strides = [1, 1]} : vector<8x128xf32> to vector<8x32xf32>
    %87 = vector.extract_strided_slice %80 {offsets = [0, 64], sizes = [8, 32], strides = [1, 1]} : vector<8x128xf32> to vector<8x32xf32>
    %88 = vector.extract_strided_slice %80 {offsets = [0, 96], sizes = [8, 32], strides = [1, 1]} : vector<8x128xf32> to vector<8x32xf32>
    %89 = arith.mulf %85, %86 : vector<8x32xf32>
    %90 = arith.mulf %69, %87 : vector<8x32xf32>
    %91 = arith.addf %89, %90 : vector<8x32xf32>
    %92 = math.tanh %91 : vector<8x32xf32>
    %93 = arith.mulf %92, %88 : vector<8x32xf32>
    %94 = vector.extract_strided_slice %10 {offsets = [4, 0, 0], sizes = [1, 8, 128], strides = [1, 1, 1]} : vector<8x8x128xf32> to vector<1x8x128xf32>
    %95 = vector.shape_cast %94 : vector<1x8x128xf32> to vector<8x128xf32>
    %cst_22 = arith.constant dense<0.000000e+00> : vector<8x128xf32>
    %96 = tpu.matmul %93, %0, %cst_22 {dimension_numbers = #tpu.dot_dimension_numbers<[1], [0], [0], [1], [0, 0, 1, 1], [], []>} : vector<8x32xf32>, vector<32x128xf32>, vector<8x128xf32> -> vector<8x128xf32>
    %97 = arith.addf %95, %96 : vector<8x128xf32>
    %98 = arith.negf %97 : vector<8x128xf32>
    %99 = math.exp %98 : vector<8x128xf32>
    %cst_23 = arith.constant 1.000000e+00 : f32
    %100 = vector.broadcast %cst_23 : f32 to vector<8x128xf32>
    %101 = arith.addf %100, %99 : vector<8x128xf32>
    %102 = arith.divf %100, %101 : vector<8x128xf32>
    %103 = vector.extract_strided_slice %102 {offsets = [0, 0], sizes = [8, 32], strides = [1, 1]} : vector<8x128xf32> to vector<8x32xf32>
    %cst_24 = arith.constant 2.000000e+00 : f32
    %104 = vector.broadcast %cst_24 : f32 to vector<8x32xf32>
    %105 = arith.mulf %104, %103 : vector<8x32xf32>
    %cst_25 = arith.constant 1.000000e+00 : f32
    %106 = vector.broadcast %cst_25 : f32 to vector<8x32xf32>
    %107 = arith.subf %105, %106 : vector<8x32xf32>
    %108 = vector.extract_strided_slice %102 {offsets = [0, 32], sizes = [8, 32], strides = [1, 1]} : vector<8x128xf32> to vector<8x32xf32>
    %109 = vector.extract_strided_slice %102 {offsets = [0, 64], sizes = [8, 32], strides = [1, 1]} : vector<8x128xf32> to vector<8x32xf32>
    %110 = vector.extract_strided_slice %102 {offsets = [0, 96], sizes = [8, 32], strides = [1, 1]} : vector<8x128xf32> to vector<8x32xf32>
    %111 = arith.mulf %107, %108 : vector<8x32xf32>
    %112 = arith.mulf %91, %109 : vector<8x32xf32>
    %113 = arith.addf %111, %112 : vector<8x32xf32>
    %114 = math.tanh %113 : vector<8x32xf32>
    %115 = arith.mulf %114, %110 : vector<8x32xf32>
    %116 = vector.extract_strided_slice %10 {offsets = [5, 0, 0], sizes = [1, 8, 128], strides = [1, 1, 1]} : vector<8x8x128xf32> to vector<1x8x128xf32>
    %117 = vector.shape_cast %116 : vector<1x8x128xf32> to vector<8x128xf32>
    %cst_26 = arith.constant dense<0.000000e+00> : vector<8x128xf32>
    %118 = tpu.matmul %115, %0, %cst_26 {dimension_numbers = #tpu.dot_dimension_numbers<[1], [0], [0], [1], [0, 0, 1, 1], [], []>} : vector<8x32xf32>, vector<32x128xf32>, vector<8x128xf32> -> vector<8x128xf32>
    %119 = arith.addf %117, %118 : vector<8x128xf32>
    %120 = arith.negf %119 : vector<8x128xf32>
    %121 = math.exp %120 : vector<8x128xf32>
    %cst_27 = arith.constant 1.000000e+00 : f32
    %122 = vector.broadcast %cst_27 : f32 to vector<8x128xf32>
    %123 = arith.addf %122, %121 : vector<8x128xf32>
    %124 = arith.divf %122, %123 : vector<8x128xf32>
    %125 = vector.extract_strided_slice %124 {offsets = [0, 0], sizes = [8, 32], strides = [1, 1]} : vector<8x128xf32> to vector<8x32xf32>
    %cst_28 = arith.constant 2.000000e+00 : f32
    %126 = vector.broadcast %cst_28 : f32 to vector<8x32xf32>
    %127 = arith.mulf %126, %125 : vector<8x32xf32>
    %cst_29 = arith.constant 1.000000e+00 : f32
    %128 = vector.broadcast %cst_29 : f32 to vector<8x32xf32>
    %129 = arith.subf %127, %128 : vector<8x32xf32>
    %130 = vector.extract_strided_slice %124 {offsets = [0, 32], sizes = [8, 32], strides = [1, 1]} : vector<8x128xf32> to vector<8x32xf32>
    %131 = vector.extract_strided_slice %124 {offsets = [0, 64], sizes = [8, 32], strides = [1, 1]} : vector<8x128xf32> to vector<8x32xf32>
    %132 = vector.extract_strided_slice %124 {offsets = [0, 96], sizes = [8, 32], strides = [1, 1]} : vector<8x128xf32> to vector<8x32xf32>
    %133 = arith.mulf %129, %130 : vector<8x32xf32>
    %134 = arith.mulf %113, %131 : vector<8x32xf32>
    %135 = arith.addf %133, %134 : vector<8x32xf32>
    %136 = math.tanh %135 : vector<8x32xf32>
    %137 = arith.mulf %136, %132 : vector<8x32xf32>
    %138 = vector.extract_strided_slice %10 {offsets = [6, 0, 0], sizes = [1, 8, 128], strides = [1, 1, 1]} : vector<8x8x128xf32> to vector<1x8x128xf32>
    %139 = vector.shape_cast %138 : vector<1x8x128xf32> to vector<8x128xf32>
    %cst_30 = arith.constant dense<0.000000e+00> : vector<8x128xf32>
    %140 = tpu.matmul %137, %0, %cst_30 {dimension_numbers = #tpu.dot_dimension_numbers<[1], [0], [0], [1], [0, 0, 1, 1], [], []>} : vector<8x32xf32>, vector<32x128xf32>, vector<8x128xf32> -> vector<8x128xf32>
    %141 = arith.addf %139, %140 : vector<8x128xf32>
    %142 = arith.negf %141 : vector<8x128xf32>
    %143 = math.exp %142 : vector<8x128xf32>
    %cst_31 = arith.constant 1.000000e+00 : f32
    %144 = vector.broadcast %cst_31 : f32 to vector<8x128xf32>
    %145 = arith.addf %144, %143 : vector<8x128xf32>
    %146 = arith.divf %144, %145 : vector<8x128xf32>
    %147 = vector.extract_strided_slice %146 {offsets = [0, 0], sizes = [8, 32], strides = [1, 1]} : vector<8x128xf32> to vector<8x32xf32>
    %cst_32 = arith.constant 2.000000e+00 : f32
    %148 = vector.broadcast %cst_32 : f32 to vector<8x32xf32>
    %149 = arith.mulf %148, %147 : vector<8x32xf32>
    %cst_33 = arith.constant 1.000000e+00 : f32
    %150 = vector.broadcast %cst_33 : f32 to vector<8x32xf32>
    %151 = arith.subf %149, %150 : vector<8x32xf32>
    %152 = vector.extract_strided_slice %146 {offsets = [0, 32], sizes = [8, 32], strides = [1, 1]} : vector<8x128xf32> to vector<8x32xf32>
    %153 = vector.extract_strided_slice %146 {offsets = [0, 64], sizes = [8, 32], strides = [1, 1]} : vector<8x128xf32> to vector<8x32xf32>
    %154 = vector.extract_strided_slice %146 {offsets = [0, 96], sizes = [8, 32], strides = [1, 1]} : vector<8x128xf32> to vector<8x32xf32>
    %155 = arith.mulf %151, %152 : vector<8x32xf32>
    %156 = arith.mulf %135, %153 : vector<8x32xf32>
    %157 = arith.addf %155, %156 : vector<8x32xf32>
    %158 = math.tanh %157 : vector<8x32xf32>
    %159 = arith.mulf %158, %154 : vector<8x32xf32>
    %160 = vector.extract_strided_slice %10 {offsets = [7, 0, 0], sizes = [1, 8, 128], strides = [1, 1, 1]} : vector<8x8x128xf32> to vector<1x8x128xf32>
    %161 = vector.shape_cast %160 : vector<1x8x128xf32> to vector<8x128xf32>
    %cst_34 = arith.constant dense<0.000000e+00> : vector<8x128xf32>
    %162 = tpu.matmul %159, %0, %cst_34 {dimension_numbers = #tpu.dot_dimension_numbers<[1], [0], [0], [1], [0, 0, 1, 1], [], []>} : vector<8x32xf32>, vector<32x128xf32>, vector<8x128xf32> -> vector<8x128xf32>
    %163 = arith.addf %161, %162 : vector<8x128xf32>
    %164 = arith.negf %163 : vector<8x128xf32>
    %165 = math.exp %164 : vector<8x128xf32>
    %cst_35 = arith.constant 1.000000e+00 : f32
    %166 = vector.broadcast %cst_35 : f32 to vector<8x128xf32>
    %167 = arith.addf %166, %165 : vector<8x128xf32>
    %168 = arith.divf %166, %167 : vector<8x128xf32>
    %169 = vector.extract_strided_slice %168 {offsets = [0, 0], sizes = [8, 32], strides = [1, 1]} : vector<8x128xf32> to vector<8x32xf32>
    %cst_36 = arith.constant 2.000000e+00 : f32
    %170 = vector.broadcast %cst_36 : f32 to vector<8x32xf32>
    %171 = arith.mulf %170, %169 : vector<8x32xf32>
    %cst_37 = arith.constant 1.000000e+00 : f32
    %172 = vector.broadcast %cst_37 : f32 to vector<8x32xf32>
    %173 = arith.subf %171, %172 : vector<8x32xf32>
    %174 = vector.extract_strided_slice %168 {offsets = [0, 32], sizes = [8, 32], strides = [1, 1]} : vector<8x128xf32> to vector<8x32xf32>
    %175 = vector.extract_strided_slice %168 {offsets = [0, 64], sizes = [8, 32], strides = [1, 1]} : vector<8x128xf32> to vector<8x32xf32>
    %176 = vector.extract_strided_slice %168 {offsets = [0, 96], sizes = [8, 32], strides = [1, 1]} : vector<8x128xf32> to vector<8x32xf32>
    %177 = arith.mulf %173, %174 : vector<8x32xf32>
    %178 = arith.mulf %157, %175 : vector<8x32xf32>
    %179 = arith.addf %177, %178 : vector<8x32xf32>
    %180 = math.tanh %179 : vector<8x32xf32>
    %181 = arith.mulf %180, %176 : vector<8x32xf32>
    %c0_38 = arith.constant 0 : index
    %c0_39 = arith.constant 0 : index
    %182 = vector.load %arg4[%c0_38, %c0_39] : memref<32x128xf32, #tpu.memory_space<vmem>>, vector<32x128xf32>
    %cst_40 = arith.constant dense<0.000000e+00> : vector<8x128xf32>
    %183 = tpu.matmul %181, %182, %cst_40 {dimension_numbers = #tpu.dot_dimension_numbers<[1], [0], [0], [1], [0, 0, 1, 1], [], []>} : vector<8x32xf32>, vector<32x128xf32>, vector<8x128xf32> -> vector<8x128xf32>
    %c0_41 = arith.constant 0 : index
    %c0_42 = arith.constant 0 : index
    %184 = vector.load %arg5[%c0_41, %c0_42] : memref<1x128xf32, #tpu.memory_space<vmem>>, vector<1x128xf32>
    %185 = vector.broadcast %184 : vector<1x128xf32> to vector<8x128xf32>
    %186 = arith.addf %183, %185 : vector<8x128xf32>
    %c0_43 = arith.constant 0 : index
    %c0_44 = arith.constant 0 : index
    %187 = vector.load %arg6[%c0_43, %c0_44] : memref<8x128xf32, #tpu.memory_space<vmem>>, vector<8x128xf32>
    tpu.vector_store %arg6[%c0_43, %c0_44], %186 {strides = array<i32>} : memref<8x128xf32, #tpu.memory_space<vmem>>, vector<8x128xf32>,
    return
  }
}

</mosaic_0001>

<llo_original>
// kernel: lstm_forward.1
$region0: #{lstm_forward.1}
  #allocation0 [shape = 'u32[]', space=smem, size = 0x4, offset = 0x4, fixed_abs, tag = 'smem constant byte address 0x4 - core index']
  #allocation1 [shape = 'u32[144,128]{1,0:T(1,128)}', space=vmem, size = 0x12000, scoped, tag = 'internal scratch']
  %s0 = inlined_call_operand.vmem [shape: f32[8,8,1], index: 0, kind: input, shape index: {}]
  %s1 = inlined_call_operand.vmem [shape: f32[1,128], index: 1, kind: input, shape index: {}]
  %s2 = inlined_call_operand.vmem [shape: f32[32,128], index: 2, kind: input, shape index: {}]
  %s3 = inlined_call_operand.vmem [shape: f32[1,128], index: 3, kind: input, shape index: {}]
  %s4 = inlined_call_operand.vmem [shape: f32[32,128], index: 4, kind: input, shape index: {}]
  %s5 = inlined_call_operand.vmem [shape: f32[1,128], index: 5, kind: input, shape index: {}]
  %s6 = inlined_call_operand.vmem [shape: f32[8,128], index: 6, kind: output, shape index: {}]
  %s7 = sld [smem:[#allocation0]]
  $region34: #{lstm_forward.1} parent=0
    _
  %s9 = ssub.s32 1, %s7
  %s10 = scalar_select 0, %s9, %s7
  // Predicated region
  $region2: #{lstm_forward.1} parent=0 // pred_check
    _
  $region3: #{lstm_forward.1} parent=0 // pred_check_branch
    %12 = sbr.rel (0) target = $region5
  $region4: #{lstm_forward.1} parent=0 // pred_region
    _
  $region5: #{lstm_forward.1} parent=0 // pred_fallthru
    _
  // Predicated region
  $region6: #{lstm_forward.1} parent=0 // pred_check
    _
  $region7: #{lstm_forward.1} parent=0 // pred_check_branch
    %14 = sbr.rel (0) target = $region9
  $region8: #{lstm_forward.1} parent=0 // pred_region
    _
  $region9: #{lstm_forward.1} parent=0 // pred_fallthru
    _
  // Predicated region
  $region10: #{lstm_forward.1} parent=0 // pred_check
    _
  $region11: #{lstm_forward.1} parent=0 // pred_check_branch
    %16 = sbr.rel (0) target = $region13
  $region12: #{lstm_forward.1} parent=0 // pred_region
    _
  $region13: #{lstm_forward.1} parent=0 // pred_fallthru
    _
  // Predicated region
  $region14: #{lstm_forward.1} parent=0 // pred_check
    _
  $region15: #{lstm_forward.1} parent=0 // pred_check_branch
    %18 = sbr.rel (0) target = $region17
  $region16: #{lstm_forward.1} parent=0 // pred_region
    _
  $region17: #{lstm_forward.1} parent=0 // pred_fallthru
    _
  // Predicated region
  $region18: #{lstm_forward.1} parent=0 // pred_check
    _
  $region19: #{lstm_forward.1} parent=0 // pred_check_branch
    %20 = sbr.rel (0) target = $region21
  $region20: #{lstm_forward.1} parent=0 // pred_region
    _
  $region21: #{lstm_forward.1} parent=0 // pred_fallthru
    _
  // Predicated region
  $region22: #{lstm_forward.1} parent=0 // pred_check
    _
  $region23: #{lstm_forward.1} parent=0 // pred_check_branch
    %22 = sbr.rel (0) target = $region25
  $region24: #{lstm_forward.1} parent=0 // pred_region
    _
  $region25: #{lstm_forward.1} parent=0 // pred_fallthru
    _
  %v23 = vld [vmem:[%s2] sm:$0xff]
  %v24 = vld [vmem:[%s2 + $0x8] sm:$0xff]
  %v25 = vld [vmem:[%s2 + $0x10] sm:$0xff]
  %v26 = vld [vmem:[%s2 + $0x18] sm:$0xff]
  %v27 = vld [vmem:[%s1] sm:$0x1]
  %v28 = vld [vmem:[%s3] sm:$0x1]
  %v29 = vld [vmem:[%s0] sm:$0xff]
  %v30 = vld [vmem:[%s0 + $0x8] sm:$0xff]
  %v31 = vld [vmem:[%s0 + $0x10] sm:$0xff]
  %v32 = vld [vmem:[%s0 + $0x18] sm:$0xff]
  %v33 = vld [vmem:[%s0 + $0x20] sm:$0xff]
  %v34 = vld [vmem:[%s0 + $0x28] sm:$0xff]
  %v35 = vld [vmem:[%s0 + $0x30] sm:$0xff]
  %v36 = vld [vmem:[%s0 + $0x38] sm:$0xff]
  %38 = vset.pattern.permute.xlu0 0
  %39 = vperm.xlu0 %38, %v29
  %v40 = vpop.permute.xlu0 %39
  %43 = vset.pattern.permute.xlu0 0
  %44 = vperm.xlu0 %43, %v30
  %v45 = vpop.permute.xlu0 %44
  %48 = vset.pattern.permute.xlu0 0
  %49 = vperm.xlu0 %48, %v31
  %v50 = vpop.permute.xlu0 %49
  %53 = vset.pattern.permute.xlu0 0
  %54 = vperm.xlu0 %53, %v32
  %v55 = vpop.permute.xlu0 %54
  %58 = vset.pattern.permute.xlu0 0
  %59 = vperm.xlu0 %58, %v33
  %v60 = vpop.permute.xlu0 %59
  %63 = vset.pattern.permute.xlu0 0
  %64 = vperm.xlu0 %63, %v34
  %v65 = vpop.permute.xlu0 %64
  %68 = vset.pattern.permute.xlu0 0
  %69 = vperm.xlu0 %68, %v35
  %v70 = vpop.permute.xlu0 %69
  %73 = vset.pattern.permute.xlu0 0
  %74 = vperm.xlu0 %73, %v36
  %v75 = vpop.permute.xlu0 %74
  %v78 = vlaneseq
  %v79 = vshrl.u32 %v78, 7
  %v80 = vsub.s32 0, %v79
  %v81 = vrot.slane %v27, %v80
  %v83 = vmul.f32 %v40, %v81
  %v84 = vmul.f32 %v45, %v81
  %v85 = vmul.f32 %v50, %v81
  %v86 = vmul.f32 %v55, %v81
  %v87 = vmul.f32 %v60, %v81
  %v88 = vmul.f32 %v65, %v81
  %v89 = vmul.f32 %v70, %v81
  %v90 = vmul.f32 %v75, %v81
  %v92 = vlaneseq
  %v93 = vshrl.u32 %v92, 7
  %v94 = vsub.s32 0, %v93
  %v95 = vrot.slane %v28, %v94
  %v97 = vadd.f32 %v83, %v95
  %v98 = vadd.f32 %v84, %v95
  %v99 = vadd.f32 %v85, %v95
  %v100 = vadd.f32 %v86, %v95
  %v101 = vadd.f32 %v87, %v95
  %v102 = vadd.f32 %v88, %v95
  %v103 = vadd.f32 %v89, %v95
  %v104 = vadd.f32 %v90, %v95
  %v105 = vxor.u32 %v97, 2147483648
  %v106 = vmul.f32 %v105, 1.442695
  %v107 = vpow.pop %v106
  %v108 = vadd.f32 %v107, 1.0
  %v109 = vrcp.pop %v108
  %v110 = vmul.f32 1.0, %v109
  %v111 = vmul.f32 %v110, 2.0
  %v112 = vsub.f32 %v111, 1.0
  %114 = vrot.lane.b32.xlu0 %v110, 96
  %v115 = vpop.permute.xlu0 %114
  %v117 = vmul.f32 %v112, %v115
  %v118 = vtanh.pop %v117
  %119 = vrot.lane.b32.xlu0 %v110, 32
  %v120 = vpop.permute.xlu0 %119
  %v122 = vmul.f32 %v118, %v120
  %vm123 = vcmask 261120
  %v125 = vsel %vm123, %v122, 0
  %127 = vmatprep.subr.mxu0 0.0
  %128 = vmatpush1.msra.mxu0 %v23
  %129 = vmatprep.subr.mxu0 0.0
  %130 = vmatpush1.msra.mxu0 %v24
  %131 = vmatprep.subr.mxu0 0.0
  %132 = vmatpush1.msra.mxu0 %v25
  %133 = vmatprep.subr.mxu0 0.0
  %134 = vmatpush1.msra.mxu0 %v26
  %135 = vmatprep.subr.mxu0 0.0
  %136 = vmatpush1.msra.mxu0 0.0
  %137 = vmatprep.subr.mxu0 0.0
  %138 = vmatpush1.msra.mxu0 0.0
  %139 = vmatprep.subr.mxu0 0.0
  %140 = vmatpush1.msra.mxu0 0.0
  %141 = vmatprep.subr.mxu0 0.0
  %142 = vmatpush1.msra.mxu0 0.0
  %143 = vmatprep.subr.mxu0 0.0
  %144 = vmatpush1.msra.mxu0 0.0
  %145 = vmatprep.subr.mxu0 0.0
  %146 = vmatpush1.msra.mxu0 0.0
  %147 = vmatprep.subr.mxu0 0.0
  %148 = vmatpush1.msra.mxu0 0.0
  %149 = vmatprep.subr.mxu0 0.0
  %150 = vmatpush1.msra.mxu0 0.0
  %151 = vmatprep.subr.mxu0 0.0
  %152 = vmatpush1.msra.mxu0 0.0
  %153 = vmatprep.subr.mxu0 0.0
  %154 = vmatpush1.msra.mxu0 0.0
  %155 = vmatprep.subr.mxu0 0.0
  %156 = vmatpush1.msra.mxu0 0.0
  %157 = vmatprep.subr.mxu0 0.0
  %158 = vmatpush1.msra.mxu0 0.0
  %159 = vmatprep.subr.mxu0 0.0
  %160 = vmatpush1.msra.mxu0 0.0
  %161 = vmatprep.subr.mxu0 0.0
  %162 = vmatpush1.msra.mxu0 0.0
  %163 = vmatprep.subr.mxu0 0.0
  %164 = vmatpush1.msra.mxu0 0.0
  %165 = vmatprep.subr.mxu0 0.0
  %166 = vmatpush1.msra.mxu0 0.0
  %167 = vmatprep.subr.mxu0 0.0
  %168 = vmatpush1.msra.mxu0 0.0
  %169 = vmatprep.subr.mxu0 0.0
  %170 = vmatpush1.msra.mxu0 0.0
  %171 = vmatprep.subr.mxu0 0.0
  %172 = vmatpush1.msra.mxu0 0.0
  %173 = vmatprep.subr.mxu0 0.0
  %174 = vmatpush1.msra.mxu0 0.0
  %175 = vmatprep.subr.mxu0 0.0
  %176 = vmatpush1.msra.mxu0 0.0
  %177 = vmatprep.subr.mxu0 0.0
  %178 = vmatpush1.msra.mxu0 0.0
  %179 = vmatprep.subr.mxu0 0.0
  %180 = vmatpush1.msra.mxu0 0.0
  %181 = vmatprep.subr.mxu0 0.0
  %182 = vmatpush1.msra.mxu0 0.0
  %183 = vmatprep.subr.mxu0 0.0
  %184 = vmatpush1.msra.mxu0 0.0
  %185 = vmatprep.subr.mxu0 0.0
  %186 = vmatpush1.msra.mxu0 0.0
  %187 = vmatprep.subr.mxu0 0.0
  %188 = vmatpush1.msra.mxu0 0.0
  %189 = vmatprep.subr.mxu0 0.0
  %190 = vmatpush1.msra.mxu0 0.0
  %191 = vmatprep.mubr.f32.mxu0 0.0
  %192 = vmatmul.mubr.f32.gmra.mrb[0].mxu0 %v125
  %v193 = vpop.f32.mrb[0].mxu0
  %v194 = vadd.f32 0.0, %v193
  %v195 = vpop.f32.mrb[0].mxu0
  %196 = vdwg.mxu0
  %v197 = vadd.f32 %v98, %v194
  %v198 = vxor.u32 %v197, 2147483648
  %v199 = vmul.f32 %v198, 1.442695
  %v200 = vpow.pop %v199
  %v201 = vadd.f32 %v200, 1.0
  %v202 = vrcp.pop %v201
  %v203 = vmul.f32 1.0, %v202
  %v204 = vmul.f32 %v203, 2.0
  %v205 = vsub.f32 %v204, 1.0
  %207 = vrot.lane.b32.xlu0 %v203, 96
  %v208 = vpop.permute.xlu0 %207
  %v210 = vmul.f32 %v205, %v208
  %211 = vrot.lane.b32.xlu0 %v203, 64
  %v212 = vpop.permute.xlu0 %211
  %v214 = vmul.f32 %v117, %v212
  %v215 = vadd.f32 %v210, %v214
  %v216 = vtanh.pop %v215
  %217 = vrot.lane.b32.xlu0 %v203, 32
  %v218 = vpop.permute.xlu0 %217
  %v220 = vmul.f32 %v216, %v218
  %v222 = vsel %vm123, %v220, 0
  %224 = vmatprep.subr.mxu0 0.0
  %225 = vmatpush1.msra.mxu0 %v23
  %226 = vmatprep.subr.mxu0 0.0
  %227 = vmatpush1.msra.mxu0 %v24
  %228 = vmatprep.subr.mxu0 0.0
  %229 = vmatpush1.msra.mxu0 %v25
  %230 = vmatprep.subr.mxu0 0.0
  %231 = vmatpush1.msra.mxu0 %v26
  %232 = vmatprep.subr.mxu0 0.0
  %233 = vmatpush1.msra.mxu0 0.0
  %234 = vmatprep.subr.mxu0 0.0
  %235 = vmatpush1.msra.mxu0 0.0
  %236 = vmatprep.subr.mxu0 0.0
  %237 = vmatpush1.msra.mxu0 0.0
  %238 = vmatprep.subr.mxu0 0.0
  %239 = vmatpush1.msra.mxu0 0.0
  %240 = vmatprep.subr.mxu0 0.0
  %241 = vmatpush1.msra.mxu0 0.0
  %242 = vmatprep.subr.mxu0 0.0
  %243 = vmatpush1.msra.mxu0 0.0
  %244 = vmatprep.subr.mxu0 0.0
  %245 = vmatpush1.msra.mxu0 0.0
  %246 = vmatprep.subr.mxu0 0.0
  %247 = vmatpush1.msra.mxu0 0.0
  %248 = vmatprep.subr.mxu0 0.0
  %249 = vmatpush1.msra.mxu0 0.0
  %250 = vmatprep.subr.mxu0 0.0
  %251 = vmatpush1.msra.mxu0 0.0
  %252 = vmatprep.subr.mxu0 0.0
  %253 = vmatpush1.msra.mxu0 0.0
  %254 = vmatprep.subr.mxu0 0.0
  %255 = vmatpush1.msra.mxu0 0.0
  %256 = vmatprep.subr.mxu0 0.0
  %257 = vmatpush1.msra.mxu0 0.0
  %258 = vmatprep.subr.mxu0 0.0
  %259 = vmatpush1.msra.mxu0 0.0
  %260 = vmatprep.subr.mxu0 0.0
  %261 = vmatpush1.msra.mxu0 0.0
  %262 = vmatprep.subr.mxu0 0.0
  %263 = vmatpush1.msra.mxu0 0.0
  %264 = vmatprep.subr.mxu0 0.0
  %265 = vmatpush1.msra.mxu0 0.0
  %266 = vmatprep.subr.mxu0 0.0
  %267 = vmatpush1.msra.mxu0 0.0
  %268 = vmatprep.subr.mxu0 0.0
  %269 = vmatpush1.msra.mxu0 0.0
  %270 = vmatprep.subr.mxu0 0.0
  %271 = vmatpush1.msra.mxu0 0.0
  %272 = vmatprep.subr.mxu0 0.0
  %273 = vmatpush1.msra.mxu0 0.0
  %274 = vmatprep.subr.mxu0 0.0
  %275 = vmatpush1.msra.mxu0 0.0
  %276 = vmatprep.subr.mxu0 0.0
  %277 = vmatpush1.msra.mxu0 0.0
  %278 = vmatprep.subr.mxu0 0.0
  %279 = vmatpush1.msra.mxu0 0.0
  %280 = vmatprep.subr.mxu0 0.0
  %281 = vmatpush1.msra.mxu0 0.0
  %282 = vmatprep.subr.mxu0 0.0
  %283 = vmatpush1.msra.mxu0 0.0
  %284 = vmatprep.subr.mxu0 0.0
  %285 = vmatpush1.msra.mxu0 0.0
  %286 = vmatprep.subr.mxu0 0.0
  %287 = vmatpush1.msra.mxu0 0.0
  %288 = vmatprep.mubr.f32.mxu0 0.0
  %289 = vmatmul.mubr.f32.gmra.mrb[0].mxu0 %v222
  %v290 = vpop.f32.mrb[0].mxu0
  %v291 = vadd.f32 0.0, %v290
  %v292 = vpop.f32.mrb[0].mxu0
  %293 = vdwg.mxu0
  %v294 = vadd.f32 %v99, %v291
  %v295 = vxor.u32 %v294, 2147483648
  %v296 = vmul.f32 %v295, 1.442695
  %v297 = vpow.pop %v296
  %v298 = vadd.f32 %v297, 1.0
  %v299 = vrcp.pop %v298
  %v300 = vmul.f32 1.0, %v299
  %v301 = vmul.f32 %v300, 2.0
  %v302 = vsub.f32 %v301, 1.0
  %304 = vrot.lane.b32.xlu0 %v300, 96
  %v305 = vpop.permute.xlu0 %304
  %v307 = vmul.f32 %v302, %v305
  %308 = vrot.lane.b32.xlu0 %v300, 64
  %v309 = vpop.permute.xlu0 %308
  %v311 = vmul.f32 %v215, %v309
  %v312 = vadd.f32 %v307, %v311
  %v313 = vtanh.pop %v312
  %314 = vrot.lane.b32.xlu0 %v300, 32
  %v315 = vpop.permute.xlu0 %314
  %v317 = vmul.f32 %v313, %v315
  %v319 = vsel %vm123, %v317, 0
  %321 = vmatprep.subr.mxu0 0.0
  %322 = vmatpush1.msra.mxu0 %v23
  %323 = vmatprep.subr.mxu0 0.0
  %324 = vmatpush1.msra.mxu0 %v24
  %325 = vmatprep.subr.mxu0 0.0
  %326 = vmatpush1.msra.mxu0 %v25
  %327 = vmatprep.subr.mxu0 0.0
  %328 = vmatpush1.msra.mxu0 %v26
  %329 = vmatprep.subr.mxu0 0.0
  %330 = vmatpush1.msra.mxu0 0.0
  %331 = vmatprep.subr.mxu0 0.0
  %332 = vmatpush1.msra.mxu0 0.0
  %333 = vmatprep.subr.mxu0 0.0
  %334 = vmatpush1.msra.mxu0 0.0
  %335 = vmatprep.subr.mxu0 0.0
  %336 = vmatpush1.msra.mxu0 0.0
  %337 = vmatprep.subr.mxu0 0.0
  %338 = vmatpush1.msra.mxu0 0.0
  %339 = vmatprep.subr.mxu0 0.0
  %340 = vmatpush1.msra.mxu0 0.0
  %341 = vmatprep.subr.mxu0 0.0
  %342 = vmatpush1.msra.mxu0 0.0
  %343 = vmatprep.subr.mxu0 0.0
  %344 = vmatpush1.msra.mxu0 0.0
  %345 = vmatprep.subr.mxu0 0.0
  %346 = vmatpush1.msra.mxu0 0.0
  %347 = vmatprep.subr.mxu0 0.0
  %348 = vmatpush1.msra.mxu0 0.0
  %349 = vmatprep.subr.mxu0 0.0
  %350 = vmatpush1.msra.mxu0 0.0
  %351 = vmatprep.subr.mxu0 0.0
  %352 = vmatpush1.msra.mxu0 0.0
  %353 = vmatprep.subr.mxu0 0.0
  %354 = vmatpush1.msra.mxu0 0.0
  %355 = vmatprep.subr.mxu0 0.0
  %356 = vmatpush1.msra.mxu0 0.0
  %357 = vmatprep.subr.mxu0 0.0
  %358 = vmatpush1.msra.mxu0 0.0
  %359 = vmatprep.subr.mxu0 0.0
  %360 = vmatpush1.msra.mxu0 0.0
  %361 = vmatprep.subr.mxu0 0.0
  %362 = vmatpush1.msra.mxu0 0.0
  %363 = vmatprep.subr.mxu0 0.0
  %364 = vmatpush1.msra.mxu0 0.0
  %365 = vmatprep.subr.mxu0 0.0
  %366 = vmatpush1.msra.mxu0 0.0
  %367 = vmatprep.subr.mxu0 0.0
  %368 = vmatpush1.msra.mxu0 0.0
  %369 = vmatprep.subr.mxu0 0.0
  %370 = vmatpush1.msra.mxu0 0.0
  %371 = vmatprep.subr.mxu0 0.0
  %372 = vmatpush1.msra.mxu0 0.0
  %373 = vmatprep.subr.mxu0 0.0
  %374 = vmatpush1.msra.mxu0 0.0
  %375 = vmatprep.subr.mxu0 0.0
  %376 = vmatpush1.msra.mxu0 0.0
  %377 = vmatprep.subr.mxu0 0.0
  %378 = vmatpush1.msra.mxu0 0.0
  %379 = vmatprep.subr.mxu0 0.0
  %380 = vmatpush1.msra.mxu0 0.0
  %381 = vmatprep.subr.mxu0 0.0
  %382 = vmatpush1.msra.mxu0 0.0
  %383 = vmatprep.subr.mxu0 0.0
  %384 = vmatpush1.msra.mxu0 0.0
  %385 = vmatprep.mubr.f32.mxu0 0.0
  %386 = vmatmul.mubr.f32.gmra.mrb[0].mxu0 %v319
  %v387 = vpop.f32.mrb[0].mxu0
  %v388 = vadd.f32 0.0, %v387
  %v389 = vpop.f32.mrb[0].mxu0
  %390 = vdwg.mxu0
  %v391 = vadd.f32 %v100, %v388
  %v392 = vxor.u32 %v391, 2147483648
  %v393 = vmul.f32 %v392, 1.442695
  %v394 = vpow.pop %v393
  %v395 = vadd.f32 %v394, 1.0
  %v396 = vrcp.pop %v395
  %v397 = vmul.f32 1.0, %v396
  %v398 = vmul.f32 %v397, 2.0
  %v399 = vsub.f32 %v398, 1.0
  %401 = vrot.lane.b32.xlu0 %v397, 96
  %v402 = vpop.permute.xlu0 %401
  %v404 = vmul.f32 %v399, %v402
  %405 = vrot.lane.b32.xlu0 %v397, 64
  %v406 = vpop.permute.xlu0 %405
  %v408 = vmul.f32 %v312, %v406
  %v409 = vadd.f32 %v404, %v408
  %v410 = vtanh.pop %v409
  %411 = vrot.lane.b32.xlu0 %v397, 32
  %v412 = vpop.permute.xlu0 %411
  %v414 = vmul.f32 %v410, %v412
  %v416 = vsel %vm123, %v414, 0
  %418 = vmatprep.subr.mxu0 0.0
  %419 = vmatpush1.msra.mxu0 %v23
  %420 = vmatprep.subr.mxu0 0.0
  %421 = vmatpush1.msra.mxu0 %v24
  %422 = vmatprep.subr.mxu0 0.0
  %423 = vmatpush1.msra.mxu0 %v25
  %424 = vmatprep.subr.mxu0 0.0
  %425 = vmatpush1.msra.mxu0 %v26
  %426 = vmatprep.subr.mxu0 0.0
  %427 = vmatpush1.msra.mxu0 0.0
  %428 = vmatprep.subr.mxu0 0.0
  %429 = vmatpush1.msra.mxu0 0.0
  %430 = vmatprep.subr.mxu0 0.0
  %431 = vmatpush1.msra.mxu0 0.0
  %432 = vmatprep.subr.mxu0 0.0
  %433 = vmatpush1.msra.mxu0 0.0
  %434 = vmatprep.subr.mxu0 0.0
  %435 = vmatpush1.msra.mxu0 0.0
  %436 = vmatprep.subr.mxu0 0.0
  %437 = vmatpush1.msra.mxu0 0.0
  %438 = vmatprep.subr.mxu0 0.0
  %439 = vmatpush1.msra.mxu0 0.0
  %440 = vmatprep.subr.mxu0 0.0
  %441 = vmatpush1.msra.mxu0 0.0
  %442 = vmatprep.subr.mxu0 0.0
  %443 = vmatpush1.msra.mxu0 0.0
  %444 = vmatprep.subr.mxu0 0.0
  %445 = vmatpush1.msra.mxu0 0.0
  %446 = vmatprep.subr.mxu0 0.0
  %447 = vmatpush1.msra.mxu0 0.0
  %448 = vmatprep.subr.mxu0 0.0
  %449 = vmatpush1.msra.mxu0 0.0
  %450 = vmatprep.subr.mxu0 0.0
  %451 = vmatpush1.msra.mxu0 0.0
  %452 = vmatprep.subr.mxu0 0.0
  %453 = vmatpush1.msra.mxu0 0.0
  %454 = vmatprep.subr.mxu0 0.0
  %455 = vmatpush1.msra.mxu0 0.0
  %456 = vmatprep.subr.mxu0 0.0
  %457 = vmatpush1.msra.mxu0 0.0
  %458 = vmatprep.subr.mxu0 0.0
  %459 = vmatpush1.msra.mxu0 0.0
  %460 = vmatprep.subr.mxu0 0.0
  %461 = vmatpush1.msra.mxu0 0.0
  %462 = vmatprep.subr.mxu0 0.0
  %463 = vmatpush1.msra.mxu0 0.0
  %464 = vmatprep.subr.mxu0 0.0
  %465 = vmatpush1.msra.mxu0 0.0
  %466 = vmatprep.subr.mxu0 0.0
  %467 = vmatpush1.msra.mxu0 0.0
  %468 = vmatprep.subr.mxu0 0.0
  %469 = vmatpush1.msra.mxu0 0.0
  %470 = vmatprep.subr.mxu0 0.0
  %471 = vmatpush1.msra.mxu0 0.0
  %472 = vmatprep.subr.mxu0 0.0
  %473 = vmatpush1.msra.mxu0 0.0
  %474 = vmatprep.subr.mxu0 0.0
  %475 = vmatpush1.msra.mxu0 0.0
  %476 = vmatprep.subr.mxu0 0.0
  %477 = vmatpush1.msra.mxu0 0.0
  %478 = vmatprep.subr.mxu0 0.0
  %479 = vmatpush1.msra.mxu0 0.0
  %480 = vmatprep.subr.mxu0 0.0
  %481 = vmatpush1.msra.mxu0 0.0
  %482 = vmatprep.mubr.f32.mxu0 0.0
  %483 = vmatmul.mubr.f32.gmra.mrb[0].mxu0 %v416
  %v484 = vpop.f32.mrb[0].mxu0
  %v485 = vadd.f32 0.0, %v484
  %v486 = vpop.f32.mrb[0].mxu0
  %487 = vdwg.mxu0
  %v488 = vadd.f32 %v101, %v485
  %v489 = vxor.u32 %v488, 2147483648
  %v490 = vmul.f32 %v489, 1.442695
  %v491 = vpow.pop %v490
  %v492 = vadd.f32 %v491, 1.0
  %v493 = vrcp.pop %v492
  %v494 = vmul.f32 1.0, %v493
  %v495 = vmul.f32 %v494, 2.0
  %v496 = vsub.f32 %v495, 1.0
  %498 = vrot.lane.b32.xlu0 %v494, 96
  %v499 = vpop.permute.xlu0 %498
  %v501 = vmul.f32 %v496, %v499
  %502 = vrot.lane.b32.xlu0 %v494, 64
  %v503 = vpop.permute.xlu0 %502
  %v505 = vmul.f32 %v409, %v503
  %v506 = vadd.f32 %v501, %v505
  %v507 = vtanh.pop %v506
  %508 = vrot.lane.b32.xlu0 %v494, 32
  %v509 = vpop.permute.xlu0 %508
  %v511 = vmul.f32 %v507, %v509
  %v513 = vsel %vm123, %v511, 0
  %515 = vmatprep.subr.mxu0 0.0
  %516 = vmatpush1.msra.mxu0 %v23
  %517 = vmatprep.subr.mxu0 0.0
  %518 = vmatpush1.msra.mxu0 %v24
  %519 = vmatprep.subr.mxu0 0.0
  %520 = vmatpush1.msra.mxu0 %v25
  %521 = vmatprep.subr.mxu0 0.0
  %522 = vmatpush1.msra.mxu0 %v26
  %523 = vmatprep.subr.mxu0 0.0
  %524 = vmatpush1.msra.mxu0 0.0
  %525 = vmatprep.subr.mxu0 0.0
  %526 = vmatpush1.msra.mxu0 0.0
  %527 = vmatprep.subr.mxu0 0.0
  %528 = vmatpush1.msra.mxu0 0.0
  %529 = vmatprep.subr.mxu0 0.0
  %530 = vmatpush1.msra.mxu0 0.0
  %531 = vmatprep.subr.mxu0 0.0
  %532 = vmatpush1.msra.mxu0 0.0
  %533 = vmatprep.subr.mxu0 0.0
  %534 = vmatpush1.msra.mxu0 0.0
  %535 = vmatprep.subr.mxu0 0.0
  %536 = vmatpush1.msra.mxu0 0.0
  %537 = vmatprep.subr.mxu0 0.0
  %538 = vmatpush1.msra.mxu0 0.0
  %539 = vmatprep.subr.mxu0 0.0
  %540 = vmatpush1.msra.mxu0 0.0
  %541 = vmatprep.subr.mxu0 0.0
  %542 = vmatpush1.msra.mxu0 0.0
  %543 = vmatprep.subr.mxu0 0.0
  %544 = vmatpush1.msra.mxu0 0.0
  %545 = vmatprep.subr.mxu0 0.0
  %546 = vmatpush1.msra.mxu0 0.0
  %547 = vmatprep.subr.mxu0 0.0
  %548 = vmatpush1.msra.mxu0 0.0
  %549 = vmatprep.subr.mxu0 0.0
  %550 = vmatpush1.msra.mxu0 0.0
  %551 = vmatprep.subr.mxu0 0.0
  %552 = vmatpush1.msra.mxu0 0.0
  %553 = vmatprep.subr.mxu0 0.0
  %554 = vmatpush1.msra.mxu0 0.0
  %555 = vmatprep.subr.mxu0 0.0
  %556 = vmatpush1.msra.mxu0 0.0
  %557 = vmatprep.subr.mxu0 0.0
  %558 = vmatpush1.msra.mxu0 0.0
  %559 = vmatprep.subr.mxu0 0.0
  %560 = vmatpush1.msra.mxu0 0.0
  %561 = vmatprep.subr.mxu0 0.0
  %562 = vmatpush1.msra.mxu0 0.0
  %563 = vmatprep.subr.mxu0 0.0
  %564 = vmatpush1.msra.mxu0 0.0
  %565 = vmatprep.subr.mxu0 0.0
  %566 = vmatpush1.msra.mxu0 0.0
  %567 = vmatprep.subr.mxu0 0.0
  %568 = vmatpush1.msra.mxu0 0.0
  %569 = vmatprep.subr.mxu0 0.0
  %570 = vmatpush1.msra.mxu0 0.0
  %571 = vmatprep.subr.mxu0 0.0
  %572 = vmatpush1.msra.mxu0 0.0
  %573 = vmatprep.subr.mxu0 0.0
  %574 = vmatpush1.msra.mxu0 0.0
  %575 = vmatprep.subr.mxu0 0.0
  %576 = vmatpush1.msra.mxu0 0.0
  %577 = vmatprep.subr.mxu0 0.0
  %578 = vmatpush1.msra.mxu0 0.0
  %579 = vmatprep.mubr.f32.mxu0 0.0
  %580 = vmatmul.mubr.f32.gmra.mrb[0].mxu0 %v513
  %v581 = vpop.f32.mrb[0].mxu0
  %v582 = vadd.f32 0.0, %v581
  %v583 = vpop.f32.mrb[0].mxu0
  %584 = vdwg.mxu0
  %v585 = vadd.f32 %v102, %v582
  %v586 = vxor.u32 %v585, 2147483648
  %v587 = vmul.f32 %v586, 1.442695
  %v588 = vpow.pop %v587
  %v589 = vadd.f32 %v588, 1.0
  %v590 = vrcp.pop %v589
  %v591 = vmul.f32 1.0, %v590
  %v592 = vmul.f32 %v591, 2.0
  %v593 = vsub.f32 %v592, 1.0
  %595 = vrot.lane.b32.xlu0 %v591, 96
  %v596 = vpop.permute.xlu0 %595
  %v598 = vmul.f32 %v593, %v596
  %599 = vrot.lane.b32.xlu0 %v591, 64
  %v600 = vpop.permute.xlu0 %599
  %v602 = vmul.f32 %v506, %v600
  %v603 = vadd.f32 %v598, %v602
  %v604 = vtanh.pop %v603
  %605 = vrot.lane.b32.xlu0 %v591, 32
  %v606 = vpop.permute.xlu0 %605
  %v608 = vmul.f32 %v604, %v606
  %v610 = vsel %vm123, %v608, 0
  %612 = vmatprep.subr.mxu0 0.0
  %613 = vmatpush1.msra.mxu0 %v23
  %614 = vmatprep.subr.mxu0 0.0
  %615 = vmatpush1.msra.mxu0 %v24
  %616 = vmatprep.subr.mxu0 0.0
  %617 = vmatpush1.msra.mxu0 %v25
  %618 = vmatprep.subr.mxu0 0.0
  %619 = vmatpush1.msra.mxu0 %v26
  %620 = vmatprep.subr.mxu0 0.0
  %621 = vmatpush1.msra.mxu0 0.0
  %622 = vmatprep.subr.mxu0 0.0
  %623 = vmatpush1.msra.mxu0 0.0
  %624 = vmatprep.subr.mxu0 0.0
  %625 = vmatpush1.msra.mxu0 0.0
  %626 = vmatprep.subr.mxu0 0.0
  %627 = vmatpush1.msra.mxu0 0.0
  %628 = vmatprep.subr.mxu0 0.0
  %629 = vmatpush1.msra.mxu0 0.0
  %630 = vmatprep.subr.mxu0 0.0
  %631 = vmatpush1.msra.mxu0 0.0
  %632 = vmatprep.subr.mxu0 0.0
  %633 = vmatpush1.msra.mxu0 0.0
  %634 = vmatprep.subr.mxu0 0.0
  %635 = vmatpush1.msra.mxu0 0.0
  %636 = vmatprep.subr.mxu0 0.0
  %637 = vmatpush1.msra.mxu0 0.0
  %638 = vmatprep.subr.mxu0 0.0
  %639 = vmatpush1.msra.mxu0 0.0
  %640 = vmatprep.subr.mxu0 0.0
  %641 = vmatpush1.msra.mxu0 0.0
  %642 = vmatprep.subr.mxu0 0.0
  %643 = vmatpush1.msra.mxu0 0.0
  %644 = vmatprep.subr.mxu0 0.0
  %645 = vmatpush1.msra.mxu0 0.0
  %646 = vmatprep.subr.mxu0 0.0
  %647 = vmatpush1.msra.mxu0 0.0
  %648 = vmatprep.subr.mxu0 0.0
  %649 = vmatpush1.msra.mxu0 0.0
  %650 = vmatprep.subr.mxu0 0.0
  %651 = vmatpush1.msra.mxu0 0.0
  %652 = vmatprep.subr.mxu0 0.0
  %653 = vmatpush1.msra.mxu0 0.0
  %654 = vmatprep.subr.mxu0 0.0
  %655 = vmatpush1.msra.mxu0 0.0
  %656 = vmatprep.subr.mxu0 0.0
  %657 = vmatpush1.msra.mxu0 0.0
  %658 = vmatprep.subr.mxu0 0.0
  %659 = vmatpush1.msra.mxu0 0.0
  %660 = vmatprep.subr.mxu0 0.0
  %661 = vmatpush1.msra.mxu0 0.0
  %662 = vmatprep.subr.mxu0 0.0
  %663 = vmatpush1.msra.mxu0 0.0
  %664 = vmatprep.subr.mxu0 0.0
  %665 = vmatpush1.msra.mxu0 0.0
  %666 = vmatprep.subr.mxu0 0.0
  %667 = vmatpush1.msra.mxu0 0.0
  %668 = vmatprep.subr.mxu0 0.0
  %669 = vmatpush1.msra.mxu0 0.0
  %670 = vmatprep.subr.mxu0 0.0
  %671 = vmatpush1.msra.mxu0 0.0
  %672 = vmatprep.subr.mxu0 0.0
  %673 = vmatpush1.msra.mxu0 0.0
  %674 = vmatprep.subr.mxu0 0.0
  %675 = vmatpush1.msra.mxu0 0.0
  %676 = vmatprep.mubr.f32.mxu0 0.0
  %677 = vmatmul.mubr.f32.gmra.mrb[0].mxu0 %v610
  %v678 = vpop.f32.mrb[0].mxu0
  %v679 = vadd.f32 0.0, %v678
  %v680 = vpop.f32.mrb[0].mxu0
  %681 = vdwg.mxu0
  %v682 = vadd.f32 %v103, %v679
  %v683 = vxor.u32 %v682, 2147483648
  %v684 = vmul.f32 %v683, 1.442695
  %v685 = vpow.pop %v684
  %v686 = vadd.f32 %v685, 1.0
  %v687 = vrcp.pop %v686
  %v688 = vmul.f32 1.0, %v687
  %v689 = vmul.f32 %v688, 2.0
  %v690 = vsub.f32 %v689, 1.0
  %692 = vrot.lane.b32.xlu0 %v688, 96
  %v693 = vpop.permute.xlu0 %692
  %v695 = vmul.f32 %v690, %v693
  %696 = vrot.lane.b32.xlu0 %v688, 64
  %v697 = vpop.permute.xlu0 %696
  %v699 = vmul.f32 %v603, %v697
  %v700 = vadd.f32 %v695, %v699
  %v701 = vtanh.pop %v700
  %702 = vrot.lane.b32.xlu0 %v688, 32
  %v703 = vpop.permute.xlu0 %702
  %v705 = vmul.f32 %v701, %v703
  %v707 = vsel %vm123, %v705, 0
  %709 = vmatprep.subr.mxu0 0.0
  %710 = vmatpush1.msra.mxu0 %v23
  %711 = vmatprep.subr.mxu0 0.0
  %712 = vmatpush1.msra.mxu0 %v24
  %713 = vmatprep.subr.mxu0 0.0
  %714 = vmatpush1.msra.mxu0 %v25
  %715 = vmatprep.subr.mxu0 0.0
  %716 = vmatpush1.msra.mxu0 %v26
  %717 = vmatprep.subr.mxu0 0.0
  %718 = vmatpush1.msra.mxu0 0.0
  %719 = vmatprep.subr.mxu0 0.0
  %720 = vmatpush1.msra.mxu0 0.0
  %721 = vmatprep.subr.mxu0 0.0
  %722 = vmatpush1.msra.mxu0 0.0
  %723 = vmatprep.subr.mxu0 0.0
  %724 = vmatpush1.msra.mxu0 0.0
  %725 = vmatprep.subr.mxu0 0.0
  %726 = vmatpush1.msra.mxu0 0.0
  %727 = vmatprep.subr.mxu0 0.0
  %728 = vmatpush1.msra.mxu0 0.0
  %729 = vmatprep.subr.mxu0 0.0
  %730 = vmatpush1.msra.mxu0 0.0
  %731 = vmatprep.subr.mxu0 0.0
  %732 = vmatpush1.msra.mxu0 0.0
  %733 = vmatprep.subr.mxu0 0.0
  %734 = vmatpush1.msra.mxu0 0.0
  %735 = vmatprep.subr.mxu0 0.0
  %736 = vmatpush1.msra.mxu0 0.0
  %737 = vmatprep.subr.mxu0 0.0
  %738 = vmatpush1.msra.mxu0 0.0
  %739 = vmatprep.subr.mxu0 0.0
  %740 = vmatpush1.msra.mxu0 0.0
  %741 = vmatprep.subr.mxu0 0.0
  %742 = vmatpush1.msra.mxu0 0.0
  %743 = vmatprep.subr.mxu0 0.0
  %744 = vmatpush1.msra.mxu0 0.0
  %745 = vmatprep.subr.mxu0 0.0
  %746 = vmatpush1.msra.mxu0 0.0
  %747 = vmatprep.subr.mxu0 0.0
  %748 = vmatpush1.msra.mxu0 0.0
  %749 = vmatprep.subr.mxu0 0.0
  %750 = vmatpush1.msra.mxu0 0.0
  %751 = vmatprep.subr.mxu0 0.0
  %752 = vmatpush1.msra.mxu0 0.0
  %753 = vmatprep.subr.mxu0 0.0
  %754 = vmatpush1.msra.mxu0 0.0
  %755 = vmatprep.subr.mxu0 0.0
  %756 = vmatpush1.msra.mxu0 0.0
  %757 = vmatprep.subr.mxu0 0.0
  %758 = vmatpush1.msra.mxu0 0.0
  %759 = vmatprep.subr.mxu0 0.0
  %760 = vmatpush1.msra.mxu0 0.0
  %761 = vmatprep.subr.mxu0 0.0
  %762 = vmatpush1.msra.mxu0 0.0
  %763 = vmatprep.subr.mxu0 0.0
  %764 = vmatpush1.msra.mxu0 0.0
  %765 = vmatprep.subr.mxu0 0.0
  %766 = vmatpush1.msra.mxu0 0.0
  %767 = vmatprep.subr.mxu0 0.0
  %768 = vmatpush1.msra.mxu0 0.0
  %769 = vmatprep.subr.mxu0 0.0
  %770 = vmatpush1.msra.mxu0 0.0
  %771 = vmatprep.subr.mxu0 0.0
  %772 = vmatpush1.msra.mxu0 0.0
  %773 = vmatprep.mubr.f32.mxu0 0.0
  %774 = vmatmul.mubr.f32.gmra.mrb[0].mxu0 %v707
  %v775 = vpop.f32.mrb[0].mxu0
  %v776 = vadd.f32 0.0, %v775
  %v777 = vpop.f32.mrb[0].mxu0
  %778 = vdwg.mxu0
  %v779 = vadd.f32 %v104, %v776
  %v780 = vxor.u32 %v779, 2147483648
  %v781 = vmul.f32 %v780, 1.442695
  %v782 = vpow.pop %v781
  %v783 = vadd.f32 %v782, 1.0
  %v784 = vrcp.pop %v783
  %v785 = vmul.f32 1.0, %v784
  %v786 = vmul.f32 %v785, 2.0
  %v787 = vsub.f32 %v786, 1.0
  %789 = vrot.lane.b32.xlu0 %v785, 96
  %v790 = vpop.permute.xlu0 %789
  %v792 = vmul.f32 %v787, %v790
  %793 = vrot.lane.b32.xlu0 %v785, 64
  %v794 = vpop.permute.xlu0 %793
  %v796 = vmul.f32 %v700, %v794
  %v797 = vadd.f32 %v792, %v796
  %v798 = vtanh.pop %v797
  %799 = vrot.lane.b32.xlu0 %v785, 32
  %v800 = vpop.permute.xlu0 %799
  %v802 = vmul.f32 %v798, %v800
  %v803 = vld [vmem:[%s4] sm:$0xff]
  %v804 = vld [vmem:[%s4 + $0x8] sm:$0xff]
  %v805 = vld [vmem:[%s4 + $0x10] sm:$0xff]
  %v806 = vld [vmem:[%s4 + $0x18] sm:$0xff]
  %v807 = vld [vmem:[%s5] sm:$0x1]
  %v809 = vlaneseq
  %v810 = vshrl.u32 %v809, 7
  %v811 = vsub.s32 0, %v810
  %v812 = vrot.slane %v807, %v811
  %v815 = vsel %vm123, %v802, 0
  %817 = vmatprep.subr.mxu0 0.0
  %818 = vmatpush1.msra.mxu0 %v803
  %819 = vmatprep.subr.mxu0 0.0
  %820 = vmatpush1.msra.mxu0 %v804
  %821 = vmatprep.subr.mxu0 0.0
  %822 = vmatpush1.msra.mxu0 %v805
  %823 = vmatprep.subr.mxu0 0.0
  %824 = vmatpush1.msra.mxu0 %v806
  %825 = vmatprep.subr.mxu0 0.0
  %826 = vmatpush1.msra.mxu0 0.0
  %827 = vmatprep.subr.mxu0 0.0
  %828 = vmatpush1.msra.mxu0 0.0
  %829 = vmatprep.subr.mxu0 0.0
  %830 = vmatpush1.msra.mxu0 0.0
  %831 = vmatprep.subr.mxu0 0.0
  %832 = vmatpush1.msra.mxu0 0.0
  %833 = vmatprep.subr.mxu0 0.0
  %834 = vmatpush1.msra.mxu0 0.0
  %835 = vmatprep.subr.mxu0 0.0
  %836 = vmatpush1.msra.mxu0 0.0
  %837 = vmatprep.subr.mxu0 0.0
  %838 = vmatpush1.msra.mxu0 0.0
  %839 = vmatprep.subr.mxu0 0.0
  %840 = vmatpush1.msra.mxu0 0.0
  %841 = vmatprep.subr.mxu0 0.0
  %842 = vmatpush1.msra.mxu0 0.0
  %843 = vmatprep.subr.mxu0 0.0
  %844 = vmatpush1.msra.mxu0 0.0
  %845 = vmatprep.subr.mxu0 0.0
  %846 = vmatpush1.msra.mxu0 0.0
  %847 = vmatprep.subr.mxu0 0.0
  %848 = vmatpush1.msra.mxu0 0.0
  %849 = vmatprep.subr.mxu0 0.0
  %850 = vmatpush1.msra.mxu0 0.0
  %851 = vmatprep.subr.mxu0 0.0
  %852 = vmatpush1.msra.mxu0 0.0
  %853 = vmatprep.subr.mxu0 0.0
  %854 = vmatpush1.msra.mxu0 0.0
  %855 = vmatprep.subr.mxu0 0.0
  %856 = vmatpush1.msra.mxu0 0.0
  %857 = vmatprep.subr.mxu0 0.0
  %858 = vmatpush1.msra.mxu0 0.0
  %859 = vmatprep.subr.mxu0 0.0
  %860 = vmatpush1.msra.mxu0 0.0
  %861 = vmatprep.subr.mxu0 0.0
  %862 = vmatpush1.msra.mxu0 0.0
  %863 = vmatprep.subr.mxu0 0.0
  %864 = vmatpush1.msra.mxu0 0.0
  %865 = vmatprep.subr.mxu0 0.0
  %866 = vmatpush1.msra.mxu0 0.0
  %867 = vmatprep.subr.mxu0 0.0
  %868 = vmatpush1.msra.mxu0 0.0
  %869 = vmatprep.subr.mxu0 0.0
  %870 = vmatpush1.msra.mxu0 0.0
  %871 = vmatprep.subr.mxu0 0.0
  %872 = vmatpush1.msra.mxu0 0.0
  %873 = vmatprep.subr.mxu0 0.0
  %874 = vmatpush1.msra.mxu0 0.0
  %875 = vmatprep.subr.mxu0 0.0
  %876 = vmatpush1.msra.mxu0 0.0
  %877 = vmatprep.subr.mxu0 0.0
  %878 = vmatpush1.msra.mxu0 0.0
  %879 = vmatprep.subr.mxu0 0.0
  %880 = vmatpush1.msra.mxu0 0.0
  %881 = vmatprep.mubr.f32.mxu0 0.0
  %882 = vmatmul.mubr.f32.gmra.mrb[0].mxu0 %v815
  %v883 = vpop.f32.mrb[0].mxu0
  %v884 = vadd.f32 %v812, %v883
  %v885 = vpop.f32.mrb[0].mxu0
  %886 = vdwg.mxu0
  %887 = vst [vmem:[%s6] sm:$0xff] %v884
  // Predicated region
  $region26: #{lstm_forward.1} parent=0 // pred_check
    _
  $region27: #{lstm_forward.1} parent=0 // pred_check_branch
    %889 = sbr.rel (0) target = $region29
  $region28: #{lstm_forward.1} parent=0 // pred_region
    _
  $region29: #{lstm_forward.1} parent=0 // pred_fallthru
    _
  // Predicated region
  $region30: #{lstm_forward.1} parent=0 // pred_check
    _
  $region31: #{lstm_forward.1} parent=0 // pred_check_branch
    %891 = sbr.rel (0) target = $region33
  $region32: #{lstm_forward.1} parent=0 // pred_region
    _
  $region33: #{lstm_forward.1} parent=0 // pred_fallthru
    _

</llo_original>
